<compile_context>
chip_gen: v7x
topology: tpu7x:2x2x1
jax: 0.10.0
libtpu: 0.0.40
codegen_flags: <defaults>
</compile_context>

<pallas_src>
import functools

import jax
import jax.numpy as jnp
from jax.experimental import pallas as pl
from jax.experimental.pallas import tpu as pltpu

_PREC = jax.lax.Precision.HIGHEST
_SQRT_2_OVER_PI = 0.7978845608028654


# -----------------------------------------------------------------------------
# Elementwise helpers (used both inside kernels and in the pure-JAX reference).
# TODO(synk): PyTorch nn.GELU defaults to the exact erf form; the tanh
#             approximation is used here (difference < ~1e-3).
def _gelu(v):
    return 0.5 * v * (1.0 + jnp.tanh(_SQRT_2_OVER_PI * (v + 0.044715 * (v * v * v))))


def _sigmoid(v):
    return 1.0 / (1.0 + jnp.exp(-v))


# -----------------------------------------------------------------------------
# Tile pickers: always return an exact divisor of the extent so no ragged/masked
# tiles are ever produced (keeps the avg-pool accumulation exact as well).
def _pick_hw_tile(hw, cap=2048):
    """Largest multiple of 128 dividing hw (capped); else the full extent."""
    if hw % 128 != 0:
        return hw
    t = min(cap, hw)
    t -= t % 128
    while hw % t != 0:
        t -= 128
    return t


def _pick_h_tile(h, cap=64):
    """Row-tile for the depthwise conv: multiple of 8 dividing h, else full h."""
    if h <= cap:
        return h
    for t in range(cap, 7, -1):
        if h % t == 0 and t % 8 == 0:
            return t
    return h


# -----------------------------------------------------------------------------
# 1x1 conv (pointwise) kernel: y = W @ x + b, optional fused activation.
def _conv1x1_kernel(x_ref, w_ref, b_ref, o_ref, *, act):
    x = x_ref[...].astype(jnp.float32)                       # (Cin, T)
    w = w_ref[...].astype(jnp.float32)                       # (Cout, Cin)
    y = jnp.dot(w, x, preferred_element_type=jnp.float32, precision=_PREC)
    y = y + b_ref[...].astype(jnp.float32)                   # bias (Cout, 1)
    if act == "gelu":
        y = _gelu(y)
    elif act == "sigmoid":
        y = _sigmoid(y)
    o_ref[...] = y.astype(o_ref.dtype)


def conv1x1(x, w, b, act=None, tile_cap=2048):
    """x: (N, Cin, H, W); w: (Cout, Cin); b: (Cout,) -> (N, Cout, H, W)."""
    N, Cin, H, W = x.shape
    Cout = w.shape[0]
    HW = H * W
    T = _pick_hw_tile(HW, tile_cap)
    x3 = x.reshape(N, Cin, HW)
    b2 = b.reshape(Cout, 1)
    out = pl.pallas_call(
        functools.partial(_conv1x1_kernel, act=act),
        out_shape=jax.ShapeDtypeStruct((N, Cout, HW), x.dtype),
        grid_spec=pl.GridSpec(
            grid=(N, HW // T),
            in_specs=[
                pl.BlockSpec((None, Cin, T), lambda n, h: (n, 0, h)),
                pl.BlockSpec((Cout, Cin), lambda n, h: (0, 0)),   # resident weight
                pl.BlockSpec((Cout, 1), lambda n, h: (0, 0)),     # resident bias
            ],
            out_specs=pl.BlockSpec((None, Cout, T), lambda n, h: (n, 0, h)),
        ),
        compiler_params=pltpu.CompilerParams(
            dimension_semantics=("parallel", "parallel")),
    )(x3, w, b2)
    return out.reshape(N, Cout, H, W)


# -----------------------------------------------------------------------------
# Fused SAL (depthwise 3x3, padding=1) + chunk + gelu(x1)*x2 gate.
# Vertical halos are provided as three row-shifted views (top/mid/bot) of the
# zero-padded input so every BlockSpec is a plain non-overlapping blocked tile.
def _sal_gate_kernel(xt_ref, xm_ref, xb_ref, w_ref, b_ref, o_ref, *, hidden, W):
    w = w_ref[...].astype(jnp.float32)                       # (C2, 3, 3)
    b = b_ref[...].astype(jnp.float32)                       # (C2, 1)
    c2 = w.shape[0]
    th = xm_ref.shape[1]
    acc = jnp.zeros((c2, th, W), jnp.float32)
    for ky, row_ref in enumerate((xt_ref, xm_ref, xb_ref)):
        xr = row_ref[...].astype(jnp.float32)                # (C2, T_H, W+2)
        for kx in range(3):
            wk = w[:, ky:ky + 1, kx:kx + 1]                  # (C2, 1, 1)
            acc = acc + xr[:, :, kx:kx + W] * wk
    y = acc + b[:, :, None]                                  # (C2, T_H, W)
    x1 = y[:hidden]
    x2 = y[hidden:]
    o_ref[...] = (_gelu(x1) * x2).astype(o_ref.dtype)


def sal_gate(x, w_sal, b_sal, row_cap=64):
    """x: (N, C2, H, W); depthwise 3x3 (pad=1) + chunk + gelu gate -> (N, C2//2, H, W)."""
    N, C2, H, W = x.shape
    hidden = C2 // 2
    T_H = _pick_h_tile(H, row_cap)
    Wp = W + 2
    xp = jnp.pad(x, ((0, 0), (0, 0), (1, 1), (1, 1)))
    x_top = xp[:, :, 0:H, :]
    x_mid = xp[:, :, 1:H + 1, :]
    x_bot = xp[:, :, 2:H + 2, :]
    b2 = b_sal.reshape(C2, 1)
    row_spec = pl.BlockSpec((None, C2, T_H, Wp), lambda n, h: (n, 0, h, 0))
    out = pl.pallas_call(
        functools.partial(_sal_gate_kernel, hidden=hidden, W=W),
        out_shape=jax.ShapeDtypeStruct((N, hidden, H, W), x.dtype),
        grid_spec=pl.GridSpec(
            grid=(N, H // T_H),
            in_specs=[
                row_spec, row_spec, row_spec,
                pl.BlockSpec((C2, 3, 3), lambda n, h: (0, 0, 0)),   # resident weight
                pl.BlockSpec((C2, 1), lambda n, h: (0, 0)),         # resident bias
            ],
            out_specs=pl.BlockSpec((None, hidden, T_H, W), lambda n, h: (n, 0, h, 0)),
        ),
        compiler_params=pltpu.CompilerParams(
            dimension_semantics=("parallel", "parallel")),
    )(x_top, x_mid, x_bot, w_sal, b2)
    return out


# -----------------------------------------------------------------------------
# channels_first LayerNorm (the reviewed kernel), now HW-tiled with one-pass stats.
def _layernorm_cf_kernel(x_ref, w_ref, b_ref, o_ref, *, eps):
    x = x_ref[...].astype(jnp.float32)                       # (C, T)
    inv_c = 1.0 / x_ref.shape[0]
    mean = jnp.sum(x, axis=0, keepdims=True) * inv_c         # (1, T)
    mean_sq = jnp.sum(x * x, axis=0, keepdims=True) * inv_c  # (1, T)
    var = jnp.maximum(mean_sq - mean * mean, 0.0)            # biased variance
    y = (x - mean) * jax.lax.rsqrt(var + eps)
    w = w_ref[...].astype(jnp.float32)                       # (C, 1), resident
    b = b_ref[...].astype(jnp.float32)                       # (C, 1), resident
    o_ref[...] = (w * y + b).astype(o_ref.dtype)


def layernorm_channels_first(x, weight, bias, eps=1e-6, tile_cap=2048):
    """x: (N, C, H, W); weight/bias: (C,). Normalization over the channel axis."""
    N, C, H, W = x.shape
    HW = H * W
    T = _pick_hw_tile(HW, tile_cap)
    x3 = x.reshape(N, C, HW)
    w2 = weight.reshape(C, 1)
    b2 = bias.reshape(C, 1)
    out = pl.pallas_call(
        functools.partial(_layernorm_cf_kernel, eps=eps),
        out_shape=jax.ShapeDtypeStruct((N, C, HW), x.dtype),
        grid_spec=pl.GridSpec(
            grid=(N, HW // T),
            in_specs=[
                pl.BlockSpec((None, C, T), lambda n, h: (n, 0, h)),
                pl.BlockSpec((C, 1), lambda n, h: (0, 0)),
                pl.BlockSpec((C, 1), lambda n, h: (0, 0)),
            ],
            out_specs=pl.BlockSpec((None, C, T), lambda n, h: (n, 0, h)),
        ),
        compiler_params=pltpu.CompilerParams(
            dimension_semantics=("parallel", "parallel")),
    )(x3, w2, b2)
    return out.reshape(N, C, H, W)


# -----------------------------------------------------------------------------
# Global average pool over H*W (accumulator across the HW grid axis).
def _avgpool_kernel(x_ref, o_ref):
    @pl.when(pl.program_id(1) == 0)
    def _():
        o_ref[...] = jnp.zeros_like(o_ref)
    o_ref[...] += jnp.sum(x_ref[...].astype(jnp.float32), axis=1, keepdims=True)


def global_avg_pool(x, tile_cap=2048):
    """x: (N, C, H, W) -> (N, C) float32 mean over H*W."""
    N, C, H, W = x.shape
    HW = H * W
    T = _pick_hw_tile(HW, tile_cap)
    x3 = x.reshape(N, C, HW)
    out = pl.pallas_call(
        _avgpool_kernel,
        out_shape=jax.ShapeDtypeStruct((N, C, 1), jnp.float32),
        grid_spec=pl.GridSpec(
            grid=(N, HW // T),
            in_specs=[pl.BlockSpec((None, C, T), lambda n, h: (n, 0, h))],
            out_specs=pl.BlockSpec((None, C, 1), lambda n, h: (n, 0, 0)),
        ),
        compiler_params=pltpu.CompilerParams(
            dimension_semantics=("parallel", "arbitrary")),
    )(x3)
    return out[:, :, 0] / HW


# -----------------------------------------------------------------------------
# Fused DFFM tail: x_local = gelu(W_lr @ x_norm + b_lr)
#                  s_attn  = sigmoid(w_se_local . x_local + s_bias_n)
#                  out     = identity * (c_attn_n * s_attn)
def _dffm_tail_kernel(id_ref, xn_ref, wlr_ref, blr_ref, wsl_ref, sb_ref, ca_ref, o_ref):
    xn = xn_ref[...].astype(jnp.float32)                     # (C, T)
    wlr = wlr_ref[...].astype(jnp.float32)                   # (rc, C)
    xl = jnp.dot(wlr, xn, preferred_element_type=jnp.float32, precision=_PREC)
    xl = _gelu(xl + blr_ref[...].astype(jnp.float32))        # (rc, T)
    wsl = wsl_ref[...].astype(jnp.float32)                   # (rc, 1)
    s = jnp.sum(wsl * xl, axis=0, keepdims=True)             # (1, T)
    s = _sigmoid(s + sb_ref[...].astype(jnp.float32))        # + per-batch scalar
    attn = ca_ref[...].astype(jnp.float32) * s               # (C, 1)*(1, T) -> (C, T)
    o_ref[...] = (id_ref[...].astype(jnp.float32) * attn).astype(o_ref.dtype)


def dffm_tail(identity, x_norm, w_lr, b_lr, w_se_local, s_bias, c_attn, tile_cap=2048):
    """identity/x_norm: (N, C, H, W); w_lr: (rc, C); b_lr: (rc,);
    w_se_local: (1, rc); s_bias: (N,); c_attn: (N, C)."""
    N, C, H, W = identity.shape
    HW = H * W
    rc = w_lr.shape[0]
    T = _pick_hw_tile(HW, tile_cap)
    id3 = identity.reshape(N, C, HW)
    xn3 = x_norm.reshape(N, C, HW)
    blr2 = b_lr.reshape(rc, 1)
    wsl2 = w_se_local.reshape(1, rc).T                       # (rc, 1)
    sb3 = s_bias.reshape(N, 1, 1).astype(jnp.float32)
    ca3 = c_attn.reshape(N, C, 1).astype(jnp.float32)
    out = pl.pallas_call(
        _dffm_tail_kernel,
        out_shape=jax.ShapeDtypeStruct((N, C, HW), identity.dtype),
        grid_spec=pl.GridSpec(
            grid=(N, HW // T),
            in_specs=[
                pl.BlockSpec((None, C, T), lambda n, h: (n, 0, h)),   # identity
                pl.BlockSpec((None, C, T), lambda n, h: (n, 0, h)),   # x_norm
                pl.BlockSpec((rc, C), lambda n, h: (0, 0)),           # w_lr (resident)
                pl.BlockSpec((rc, 1), lambda n, h: (0, 0)),           # b_lr
                pl.BlockSpec((rc, 1), lambda n, h: (0, 0)),           # w_se local half
                pl.BlockSpec((None, 1, 1), lambda n, h: (n, 0, 0)),   # s_bias[n]
                pl.BlockSpec((None, C, 1), lambda n, h: (n, 0, 0)),   # c_attn[n]
            ],
            out_specs=pl.BlockSpec((None, C, T), lambda n, h: (n, 0, h)),
        ),
        compiler_params=pltpu.CompilerParams(
            dimension_semantics=("parallel", "parallel")),
    )(id3, xn3, w_lr, blr2, wsl2, sb3, ca3)
    return out.reshape(N, C, H, W)


# -----------------------------------------------------------------------------
# Full SADFFM forward (Pallas kernels + tiny pooled-vector glue).
def sadffm_forward(x, p, eps=1e-6):
    N, C, H, W = x.shape
    rc = p["w_gr"].shape[0]

    h1 = conv1x1(x, p["w_in"], p["b_in"])                    # linear_in
    g = sal_gate(h1, p["w_sal"], p["b_sal"])                 # SAL + chunk + gelu gate
    y = conv1x1(g, p["w_out"], p["b_out"])                   # linear_out

    # ---- DFFM ----
    yn = layernorm_channels_first(y, p["ln_w"], p["ln_b"], eps=eps)
    pooled = global_avg_pool(yn)                             # (N, C)

    # Tiny per-batch channel ops on pooled features: plain JAX (O(N*C) work).
    xg = _gelu(jnp.dot(pooled, p["w_gr"].T, precision=_PREC) + p["b_gr"])        # (N, rc)
    c_attn = _sigmoid(jnp.dot(xg, p["w_ce"].T, precision=_PREC) + p["b_ce"])     # (N, C)
    w_se_local = p["w_se"][:, :rc]                                               # (1, rc)
    w_se_global = p["w_se"][:, rc:]                                              # (1, rc)
    s_bias = jnp.dot(xg, w_se_global.T, precision=_PREC)[:, 0] + p["b_se"][0]    # (N,)

    out = dffm_tail(y, yn, p["w_lr"], p["b_lr"], w_se_local, s_bias, c_attn)
    # Dropout(p=0.0) is the identity.
    return out


# -----------------------------------------------------------------------------
# Pure-JAX reference of the PyTorch module (same tanh-GELU substitution).
def sadffm_reference(x, p, eps=1e-6):
    N, C, H, W = x.shape

    def conv1x1_ref(v, w, b):
        return jnp.einsum("nchw,oc->nohw", v, w, precision=_PREC) + b[None, :, None, None]

    h1 = conv1x1_ref(x, p["w_in"], p["b_in"])
    C2 = h1.shape[1]
    hidden = C2 // 2
    hp = jnp.pad(h1, ((0, 0), (0, 0), (1, 1), (1, 1)))
    acc = jnp.zeros_like(h1)
    for ky in range(3):
        for kx in range(3):
            acc = acc + hp[:, :, ky:ky + H, kx:kx + W] * p["w_sal"][None, :, ky, kx, None, None]
    sal = acc + p["b_sal"][None, :, None, None]
    x1, x2 = sal[:, :hidden], sal[:, hidden:]
    g = _gelu(x1) * x2
    y = conv1x1_ref(g, p["w_out"], p["b_out"])

    u = jnp.mean(y, axis=1, keepdims=True)
    s = jnp.mean((y - u) ** 2, axis=1, keepdims=True)
    yn = (y - u) / jnp.sqrt(s + eps)
    yn = p["ln_w"][None, :, None, None] * yn + p["ln_b"][None, :, None, None]

    pooled = jnp.mean(yn, axis=(2, 3))                                            # (N, C)
    rc = p["w_gr"].shape[0]
    xg = _gelu(jnp.dot(pooled, p["w_gr"].T, precision=_PREC) + p["b_gr"])         # (N, rc)
    xl = _gelu(conv1x1_ref(yn, p["w_lr"], p["b_lr"]))                             # (N, rc, H, W)
    c_attn = _sigmoid(jnp.dot(xg, p["w_ce"].T, precision=_PREC) + p["b_ce"])      # (N, C)
    cat = jnp.concatenate(
        [xl, jnp.broadcast_to(xg[:, :, None, None], (N, rc, H, W))], axis=1)
    s_map = jnp.einsum("nchw,oc->nohw", cat, p["w_se"], precision=_PREC) + p["b_se"][None, :, None, None]
    s_attn = _sigmoid(s_map)
    attn = c_attn[:, :, None, None] * s_attn
    return y * attn


if __name__ == "__main__":
    key = jax.random.PRNGKey(0)
    N, dim, H, W = 2, 4, 16, 16
    expand_ratio = 2.0
    hidden = int(dim * expand_ratio)          # 8
    C2 = hidden * 2                           # 16
    rc = int(dim * 0.25)                      # 1

    ks = jax.random.split(key, 16)
    params = {
        "w_in":  0.3 * jax.random.normal(ks[0], (C2, dim), jnp.float32),
        "b_in":  0.1 * jax.random.normal(ks[1], (C2,), jnp.float32),
        "w_sal": 0.3 * jax.random.normal(ks[2], (C2, 3, 3), jnp.float32),
        "b_sal": 0.1 * jax.random.normal(ks[3], (C2,), jnp.float32),
        "w_out": 0.3 * jax.random.normal(ks[4], (dim, hidden), jnp.float32),
        "b_out": 0.1 * jax.random.normal(ks[5], (dim,), jnp.float32),
        "ln_w":  jnp.ones((dim,), jnp.float32),
        "ln_b":  jnp.zeros((dim,), jnp.float32),
        "w_gr":  0.3 * jax.random.normal(ks[6], (rc, dim), jnp.float32),
        "b_gr":  0.1 * jax.random.normal(ks[7], (rc,), jnp.float32),
        "w_lr":  0.3 * jax.random.normal(ks[8], (rc, dim), jnp.float32),
        "b_lr":  0.1 * jax.random.normal(ks[9], (rc,), jnp.float32),
        "w_ce":  0.3 * jax.random.normal(ks[10], (dim, rc), jnp.float32),
        "b_ce":  0.1 * jax.random.normal(ks[11], (dim,), jnp.float32),
        "w_se":  0.3 * jax.random.normal(ks[12], (1, 2 * rc), jnp.float32),
        "b_se":  0.1 * jax.random.normal(ks[13], (1,), jnp.float32),
    }
    x = jax.random.normal(ks[14], (N, dim, H, W), dtype=jnp.float32)

    out = sadffm_forward(x, params)
    out = jax.block_until_ready(out)

    ref = sadffm_reference(x, params)
    ref = jax.block_until_ready(ref)

    assert out.shape == x.shape
    max_diff = float(jnp.max(jnp.abs(out - ref)))
    assert jnp.allclose(out, ref, atol=5e-4, rtol=5e-4), f"mismatch vs reference, max abs diff = {max_diff}"

    print("KERNEL_OK")
</pallas_src>

<mosaic_0001>
module attributes {stable_mosaic.version = 11 : i64} {
  func.func @_conv1x1_kernel(%arg0: i32, %arg1: i32, %arg2: memref<1x4x256xf32, #tpu.memory_space<vmem>>, %arg3: memref<16x4xf32, #tpu.memory_space<vmem>>, %arg4: memref<16x1xf32, #tpu.memory_space<vmem>>, %arg5: memref<1x16x256xf32, #tpu.memory_space<vmem>>) attributes {dimension_semantics = [#tpu.dimension_semantics<parallel>, #tpu.dimension_semantics<parallel>], iteration_bounds = array<i64: 2, 1>, scalar_prefetch = 0 : i64, scratch_operands = 0 : i64, tpu.core_type = #tpu.core_type<tc>, window_params = [{transform_indices = @transform_0, window_bounds = array<i64: 1, 4, 256>}, {pipeline_mode = #tpu.pipeline_mode<synchronous>, transform_indices = @transform_1, window_bounds = array<i64: 16, 4>}, {pipeline_mode = #tpu.pipeline_mode<synchronous>, transform_indices = @transform_2, window_bounds = array<i64: 16, 1>}, {transform_indices = @transform_3, window_bounds = array<i64: 1, 16, 256>}]} {
    %c0 = arith.constant 0 : index
    %c0_0 = arith.constant 0 : index
    %c0_1 = arith.constant 0 : index
    %0 = vector.load %arg2[%c0, %c0_0, %c0_1] : memref<1x4x256xf32, #tpu.memory_space<vmem>>, vector<1x4x256xf32>
    %1 = vector.shape_cast %0 : vector<1x4x256xf32> to vector<4x256xf32>
    %c0_2 = arith.constant 0 : index
    %c0_3 = arith.constant 0 : index
    %2 = vector.load %arg3[%c0_2, %c0_3] : memref<16x4xf32, #tpu.memory_space<vmem>>, vector<16x4xf32>
    %cst = arith.constant dense<0.000000e+00> : vector<16x256xf32>
    %3 = tpu.matmul %2, %1, %cst {dimension_numbers = #tpu.dot_dimension_numbers<[1], [0], [0], [1], [0, 0, 1, 1], [], []>, precision = #tpu.contract_precision<fp32>} : vector<16x4xf32>, vector<4x256xf32>, vector<16x256xf32> -> vector<16x256xf32>
    %c0_4 = arith.constant 0 : index
    %c0_5 = arith.constant 0 : index
    %4 = vector.load %arg4[%c0_4, %c0_5] : memref<16x1xf32, #tpu.memory_space<vmem>>, vector<16x1xf32>
    %5 = vector.broadcast %4 : vector<16x1xf32> to vector<16x256xf32>
    %6 = arith.addf %3, %5 : vector<16x256xf32>
    %c0_6 = arith.constant 0 : index
    %c0_7 = arith.constant 0 : index
    %c0_8 = arith.constant 0 : index
    %7 = vector.load %arg5[%c0_6, %c0_7, %c0_8] : memref<1x16x256xf32, #tpu.memory_space<vmem>>, vector<1x16x256xf32>
    %8 = vector.shape_cast %7 : vector<1x16x256xf32> to vector<16x256xf32>
    %9 = vector.shape_cast %6 : vector<16x256xf32> to vector<1x16x256xf32>
    tpu.vector_store %arg5[%c0_6, %c0_7, %c0_8], %9 {strides = array<i32>} : memref<1x16x256xf32, #tpu.memory_space<vmem>>, vector<1x16x256xf32>,
    return
  }
  func.func @transform_0(%arg0: i32, %arg1: i32) -> (i32, i32, i32) {
    %c0_i32 = arith.constant 0 : i32
    %c0_i32_0 = arith.constant 0 : i32
    return %arg0, %c0_i32, %arg1 : i32, i32, i32
  }
  func.func @transform_1(%arg0: i32, %arg1: i32) -> (i32, i32) {
    %c0_i32 = arith.constant 0 : i32
    %c0_i32_0 = arith.constant 0 : i32
    %c0_i32_1 = arith.constant 0 : i32
    return %c0_i32, %c0_i32_0 : i32, i32
  }
  func.func @transform_2(%arg0: i32, %arg1: i32) -> (i32, i32) {
    %c0_i32 = arith.constant 0 : i32
    %c0_i32_0 = arith.constant 0 : i32
    %c0_i32_1 = arith.constant 0 : i32
    return %c0_i32, %c0_i32_0 : i32, i32
  }
  func.func @transform_3(%arg0: i32, %arg1: i32) -> (i32, i32, i32) {
    %c0_i32 = arith.constant 0 : i32
    %c0_i32_0 = arith.constant 0 : i32
    return %arg0, %c0_i32, %arg1 : i32, i32, i32
  }
}

</mosaic_0001>

<llo_original>
// kernel: tpu_custom_call.1
$region0: #{tpu_custom_call.1}
  #allocation0 [shape = 'u32[]', space=smem, size = 0x4, offset = 0x4, fixed_abs, tag = 'smem constant byte address 0x4 - core index']
  #allocation1 [shape = 'u32[144,128]{1,0:T(1,128)}', space=vmem, size = 0x12000, scoped, tag = 'internal scratch']
  %s0 = inlined_call_operand.vmem [shape: f32[2,4,256], index: 0, kind: input, shape index: {}]
  %s1 = inlined_call_operand.vmem [shape: f32[16,4], index: 1, kind: input, shape index: {}]
  %s2 = inlined_call_operand.vmem [shape: f32[16,1], index: 2, kind: input, shape index: {}]
  %s3 = inlined_call_operand.hbm [shape: f32[2,16,256], index: 3, kind: output, shape index: {}]
  %s4 = sld [smem:[#allocation0]]
  $region45: #{tpu_custom_call.1} parent=0
    _
  %s6 = ssub.s32 1, %s4
  %s7 = scalar_select 0, %s6, %s4
  $region1: #{tpu_custom_call.1} parent=0
    #allocation2 [shape = 'u8[32768]{0}', space=vmem, size = 0x8000, scoped, tag = 'output window, operand 0']
    #allocation3 [shape = 's32[2]{0}', space=sflag, size = 0x8, scoped, tag = 'scoped memory for tpu_custom_call.1']
    %8 = vsyncpa [#allocation3], 0
    %s9 = scalar_lea.sflag [#allocation3], 1
    %10 = vsyncpa %s9, 0
    loop: start=0, step=1, limit=4
    $region2: #{tpu_custom_call.1} parent=1 // loop_pre_header
      _
    $region3: #{tpu_custom_call.1} parent=1 // loop_header
      %s12 = sphi 0, %s16
      %p13 = scmp.ge.s32.totalorder %s12, 4
      %s19 = sphi 0, %s31
      %s20 = sphi 0, %s27
      %s21 = sphi 0, %s19
      %s22 = sphi 0, %s20
      %s23 = sphi 0, %s21
      %s24 = sphi 0, %s22
      %s36 = sphi 0, %s38
      %s39 = sphi 0, %s36
      %s40 = sphi 0, %s39
      %s56 = sphi 0, %s40
      %s60 = sphi 0, %s60
      %s62 = sphi 0, %s60
      %s63 = sphi 0, %s62
      %s77 = sphi 0, %s63
      %s81 = sphi 0, %s81
      %s83 = sphi 0, %s81
      %s84 = sphi 0, %s83
      %s98 = sphi 0, %s84
      %s106 = sphi 0, %s108
      %s109 = sphi 0, %s106
      %s110 = sphi 0, %s109
      %s126 = sphi 0, %s110
    $region4: #{tpu_custom_call.1} parent=1 // loop_header_branch
      %15 = sbr.rel (%p13) target = $region8
    $region5: #{tpu_custom_call.1} parent=1 // loop_body
      %s17 = ssub.s32 %s12, 1
      %s18 = ssub.s32 %s12, 2
      %s25 = sadd.s32 1, %s20
      %p26 = scmp.ge.s32.totalorder %s25, 1
      %s27 = scalar_select %p26, 0, %s25
      %s28 = sadd.s32 1, %s19
      %s29 = scalar_select %p26, %s28, %s19
      %p30 = scmp.ge.s32.totalorder %s29, 2
      %s31 = scalar_select %p30, 0, %s29
      %s32 = ssub.s32 %s19, %s31
      %s33 = ssub.s32 %s20, %s27
      %s34 = sor.u32 %s32, %s33
      %p35 = scmp.eq.s32.totalorder %s34, 0
      %s37 = sadd.s32 %s36, 1
      %s38 = scalar_select %p35, %s36, %s37
      %p41 = pneg %p35
      %p42 = scmp.eq.s32.totalorder %s12, 1
      %p43 = por %p41, %p42
      %p44 = scmp.ne.s32.totalorder %s36, %s39
      %p45 = scmp.eq.s32.totalorder %s12, 0
      %p46 = por %p44, %p45
      %p47 = scmp.ne.s32.totalorder %s36, %s39
      %p48 = scmp.eq.s32.totalorder %s17, 1
      %p49 = por %p47, %p48
      %p50 = scmp.ne.s32.totalorder %s39, %s40
      %p51 = scmp.eq.s32.totalorder %s17, 0
      %p52 = por %p50, %p51
      %p53 = scmp.ne.s32.totalorder %s39, %s40
      %p54 = scmp.eq.s32.totalorder %s18, 1
      %p55 = por %p53, %p54
      %p57 = scmp.ne.s32.totalorder %s40, %s56
      %p58 = scmp.eq.s32.totalorder %s18, 0
      %p59 = por %p57, %p58
      %s61 = sadd.s32 %s60, 1
      %p64 = scmp.eq.s32.totalorder %s12, 1
      %p65 = scmp.ne.s32.totalorder %s60, %s62
      %p66 = scmp.eq.s32.totalorder %s12, 0
      %p67 = por %p65, %p66
      %p68 = scmp.ne.s32.totalorder %s60, %s62
      %p69 = scmp.eq.s32.totalorder %s17, 1
      %p70 = por %p68, %p69
      %p71 = scmp.ne.s32.totalorder %s62, %s63
      %p72 = scmp.eq.s32.totalorder %s17, 0
      %p73 = por %p71, %p72
      %p74 = scmp.ne.s32.totalorder %s62, %s63
      %p75 = scmp.eq.s32.totalorder %s18, 1
      %p76 = por %p74, %p75
      %p78 = scmp.ne.s32.totalorder %s63, %s77
      %p79 = scmp.eq.s32.totalorder %s18, 0
      %p80 = por %p78, %p79
      %s82 = sadd.s32 %s81, 1
      %p85 = scmp.eq.s32.totalorder %s12, 1
      %p86 = scmp.ne.s32.totalorder %s81, %s83
      %p87 = scmp.eq.s32.totalorder %s12, 0
      %p88 = por %p86, %p87
      %p89 = scmp.ne.s32.totalorder %s81, %s83
      %p90 = scmp.eq.s32.totalorder %s17, 1
      %p91 = por %p89, %p90
      %p92 = scmp.ne.s32.totalorder %s83, %s84
      %p93 = scmp.eq.s32.totalorder %s17, 0
      %p94 = por %p92, %p93
      %p95 = scmp.ne.s32.totalorder %s83, %s84
      %p96 = scmp.eq.s32.totalorder %s18, 1
      %p97 = por %p95, %p96
      %p99 = scmp.ne.s32.totalorder %s84, %s98
      %p100 = scmp.eq.s32.totalorder %s18, 0
      %p101 = por %p99, %p100
      %s102 = ssub.s32 %s19, %s31
      %s103 = ssub.s32 %s20, %s27
      %s104 = sor.u32 %s102, %s103
      %p105 = scmp.eq.s32.totalorder %s104, 0
      %s107 = sadd.s32 %s106, 1
      %s108 = scalar_select %p105, %s106, %s107
      %p111 = pneg %p105
      %p112 = scmp.eq.s32.totalorder %s12, 1
      %p113 = por %p111, %p112
      %p114 = scmp.ne.s32.totalorder %s106, %s109
      %p115 = scmp.eq.s32.totalorder %s12, 0
      %p116 = por %p114, %p115
      %p117 = scmp.ne.s32.totalorder %s106, %s109
      %p118 = scmp.eq.s32.totalorder %s17, 1
      %p119 = por %p117, %p118
      %p120 = scmp.ne.s32.totalorder %s109, %s110
      %p121 = scmp.eq.s32.totalorder %s17, 0
      %p122 = por %p120, %p121
      %p123 = scmp.ne.s32.totalorder %s109, %s110
      %p124 = scmp.eq.s32.totalorder %s18, 1
      %p125 = por %p123, %p124
      %p127 = scmp.ne.s32.totalorder %s110, %s126
      %p128 = scmp.eq.s32.totalorder %s18, 0
      %p129 = por %p127, %p128
      %p130 = scmp.le.s32.totalorder 1, %s12
      %p131 = scmp.lt.s32.totalorder %s12, 3
      %p132 = pnand %p130, %p131
      %p133 = pneg %p132
      // Predicated region
      $region9: #{tpu_custom_call.1} parent=5 // pred_check
        _
      $region10: #{tpu_custom_call.1} parent=5 // pred_check_branch
        %135 = sbr.rel (%p132) target = $region12
      $region11: #{tpu_custom_call.1} parent=5 // pred_region
        %s136 = ssub.s32 %s12, 1
        // Predicated region
        $region13: #{tpu_custom_call.1} parent=11 // pred_check
          %p137 = pneg %p73
        $region14: #{tpu_custom_call.1} parent=11 // pred_check_branch
          %139 = sbr.rel (%p137) target = $region16
        $region15: #{tpu_custom_call.1} parent=11 // pred_region
          _
        $region16: #{tpu_custom_call.1} parent=11 // pred_fallthru
          _
        // Predicated region
        $region17: #{tpu_custom_call.1} parent=11 // pred_check
          %p140 = pneg %p94
        $region18: #{tpu_custom_call.1} parent=11 // pred_check_branch
          %142 = sbr.rel (%p140) target = $region20
        $region19: #{tpu_custom_call.1} parent=11 // pred_region
          _
        $region20: #{tpu_custom_call.1} parent=11 // pred_fallthru
          _
      $region12: #{tpu_custom_call.1} parent=5 // pred_fallthru
        _
      %p143 = scmp.lt.s32.totalorder %s12, 2
      // Predicated region
      $region21: #{tpu_custom_call.1} parent=5 // pred_check
        %p144 = pneg %p143
      $region22: #{tpu_custom_call.1} parent=5 // pred_check_branch
        %146 = sbr.rel (%p144) target = $region24
      $region23: #{tpu_custom_call.1} parent=5 // pred_region
        // Predicated region
        $region25: #{tpu_custom_call.1} parent=23 // pred_check
          %p147 = pneg %p46
        $region26: #{tpu_custom_call.1} parent=23 // pred_check_branch
          %149 = sbr.rel (%p147) target = $region28
        $region27: #{tpu_custom_call.1} parent=23 // pred_region
          %s150 = smul.u32 2, %s20
          %p151 = scmp.lt.s32.totalorder %s19, 1
          %s152 = scalar_select %p151, %s19, 1
          %p153 = scmp.lt.s32.totalorder %s150, 1
          %s154 = scalar_select %p153, %s150, 1
          %s155 = smul.addr %s152, 2
          %s156 = sadd.s32 %s154, %s155
          %s157 = smul.addr %s156, 4
          %s158 = scalar_lea.vmem %s0, %s157
          %s159 = smul.u32 2, %s20
        $region28: #{tpu_custom_call.1} parent=23 // pred_fallthru
          _
      $region24: #{tpu_custom_call.1} parent=5 // pred_fallthru
        _
      %p160 = scmp.le.s32.totalorder 1, %s12
      %p161 = scmp.lt.s32.totalorder %s12, 3
      %p162 = pnand %p160, %p161
      %p163 = pneg %p162
      // Predicated region
      $region29: #{tpu_custom_call.1} parent=5 // pred_check
        _
      $region30: #{tpu_custom_call.1} parent=5 // pred_check_branch
        %165 = sbr.rel (%p162) target = $region32
      $region31: #{tpu_custom_call.1} parent=5 // pred_region
        %s166 = ssub.s32 %s12, 1
        %s167 = smul.u32 2, %s22
        %p168 = scmp.lt.s32.totalorder %s21, 1
        %s169 = scalar_select %p168, %s21, 1
        %p170 = scmp.lt.s32.totalorder %s167, 1
        %s171 = scalar_select %p170, %s167, 1
        %s172 = smul.addr %s169, 2
        %s173 = sadd.s32 %s171, %s172
        %s174 = smul.addr %s173, 4
        %s175 = scalar_lea.vmem %s0, %s174
        %p176 = pneg %p52
        %p177 = pneg %p49
        %p178 = pneg %p73
        %p179 = pneg %p70
        %p180 = pneg %p94
        %p181 = pneg %p91
        %p182 = pneg %p122
        %p183 = pneg %p119
        %s184 = sand.u32 %s109, 1
        %s185 = scalar_lea.sflag [#allocation3], %s184
        %s186 = sand.u32 %s109, 1
        %s187 = smul.addr %s186, 32
        %s188 = scalar_lea.vmem [#allocation2], %s187
        %s189 = smul.u32 2, %s22
        %p190 = scmp.lt.s32.totalorder %s21, 1
        %s191 = scalar_select %p190, %s21, 1
        %p192 = scmp.lt.s32.totalorder %s189, 1
        %s193 = scalar_select %p192, %s189, 1
        %s194 = smul.addr %s191, 2
        %s195 = sadd.s32 %s193, %s194
        %s196 = smul.addr %s195, 4
        %s197 = scalar_lea.vmem %s0, %s196
        %s198 = smul.u32 2, %s22
        %s199 = smul.u32 2, %s22
        %v200 = vld [vmem:[%s197] sm:$0xff]
        %v201 = vld [vmem:[%s1] sm:$0xff]
        %v202 = vld [vmem:[%s1 + $0x8] sm:$0xff]
        %v203 = vld [vmem:[%s2] sm:$0xff]
        %v204 = vld [vmem:[%s2 + $0x8] sm:$0xff]
        %206 = vset.pattern.permute.xlu0 0
        %207 = vperm.xlu0 %206, %v203
        %v208 = vpop.permute.xlu0 %207
        %211 = vset.pattern.permute.xlu0 0
        %212 = vperm.xlu0 %211, %v204
        %v213 = vpop.permute.xlu0 %212
        %v216 = vcombine.high %v200, %v200
        %vm217 = vcmask 31744
        %v219 = vsel %vm217, %v201, 0
        %v222 = vsel %vm217, %v202, 0
        %vm224 = vcmask 1043456
        %v225 = vsel %vm224, %v200, 0
        %v227 = vsel %vm224, %v216, 0
        %v229 = vand.u32 %v227, 4294901760
        %230 = vmatprep.subr.mxu0 %v229
        %v231 = vand.u32 %v225, 4294901760
        %232 = vmatpush1.msra.mxu0 %v231
        %233 = vmatprep.subr.mxu0 0.0
        %234 = vmatpush1.msra.mxu0 0.0
        %235 = vmatprep.subr.mxu0 0.0
        %236 = vmatpush1.msra.mxu0 0.0
        %237 = vmatprep.subr.mxu0 0.0
        %238 = vmatpush1.msra.mxu0 0.0
        %239 = vmatprep.subr.mxu0 0.0
        %240 = vmatpush1.msra.mxu0 0.0
        %241 = vmatprep.subr.mxu0 0.0
        %242 = vmatpush1.msra.mxu0 0.0
        %243 = vmatprep.subr.mxu0 0.0
        %244 = vmatpush1.msra.mxu0 0.0
        %245 = vmatprep.subr.mxu0 0.0
        %246 = vmatpush1.msra.mxu0 0.0
        %247 = vmatprep.subr.mxu0 0.0
        %248 = vmatpush1.msra.mxu0 0.0
        %249 = vmatprep.subr.mxu0 0.0
        %250 = vmatpush1.msra.mxu0 0.0
        %251 = vmatprep.subr.mxu0 0.0
        %252 = vmatpush1.msra.mxu0 0.0
        %253 = vmatprep.subr.mxu0 0.0
        %254 = vmatpush1.msra.mxu0 0.0
        %255 = vmatprep.subr.mxu0 0.0
        %256 = vmatpush1.msra.mxu0 0.0
        %257 = vmatprep.subr.mxu0 0.0
        %258 = vmatpush1.msra.mxu0 0.0
        %259 = vmatprep.subr.mxu0 0.0
        %260 = vmatpush1.msra.mxu0 0.0
        %261 = vmatprep.subr.mxu0 0.0
        %262 = vmatpush1.msra.mxu0 0.0
        %263 = vmatprep.subr.mxu0 0.0
        %264 = vmatpush1.msra.mxu0 0.0
        %265 = vmatprep.subr.mxu0 0.0
        %266 = vmatpush1.msra.mxu0 0.0
        %267 = vmatprep.subr.mxu0 0.0
        %268 = vmatpush1.msra.mxu0 0.0
        %269 = vmatprep.subr.mxu0 0.0
        %270 = vmatpush1.msra.mxu0 0.0
        %271 = vmatprep.subr.mxu0 0.0
        %272 = vmatpush1.msra.mxu0 0.0
        %273 = vmatprep.subr.mxu0 0.0
        %274 = vmatpush1.msra.mxu0 0.0
        %275 = vmatprep.subr.mxu0 0.0
        %276 = vmatpush1.msra.mxu0 0.0
        %277 = vmatprep.subr.mxu0 0.0
        %278 = vmatpush1.msra.mxu0 0.0
        %279 = vmatprep.subr.mxu0 0.0
        %280 = vmatpush1.msra.mxu0 0.0
        %281 = vmatprep.subr.mxu0 0.0
        %282 = vmatpush1.msra.mxu0 0.0
        %283 = vmatprep.subr.mxu0 0.0
        %284 = vmatpush1.msra.mxu0 0.0
        %285 = vmatprep.subr.mxu0 0.0
        %286 = vmatpush1.msra.mxu0 0.0
        %287 = vmatprep.subr.mxu0 0.0
        %288 = vmatpush1.msra.mxu0 0.0
        %289 = vmatprep.subr.mxu0 0.0
        %290 = vmatpush1.msra.mxu0 0.0
        %291 = vmatprep.subr.mxu0 0.0
        %292 = vmatpush1.msra.mxu0 0.0
        %293 = vmatprep.subr.mxu0 0.0
        %294 = vmatpush1.msra.mxu0 0.0
        %295 = vmatprep.mubr.f32.mxu0 0.0
        %v296 = vand.u32 %v219, 4294901760
        %v297 = vsub.f32 %v219, %v296
        %v298 = vand.u32 %v297, 4294901760
        %v299 = vsub.f32 %v297, %v298
        %v300 = vand.u32 %v299, 4294901760
        %301 = vmatmul.mubr.f32.gmra.mrb[0].mxu0 %v300
        %v302 = vpop.f32.mrb[0].mxu0
        %v303 = vadd.f32 %v208, %v302
        %v304 = vpop.f32.mrb[0].mxu0
        %v305 = vadd.f32 %v208, %v304
        %306 = vmatprep.mubr.f32.mxu0 0.0
        %v307 = vand.u32 %v222, 4294901760
        %v308 = vsub.f32 %v222, %v307
        %v309 = vand.u32 %v308, 4294901760
        %v310 = vsub.f32 %v308, %v309
        %v311 = vand.u32 %v310, 4294901760
        %312 = vmatmul.mubr.f32.gmra.mrb[0].mxu0 %v311
        %v313 = vpop.f32.mrb[0].mxu0
        %v314 = vadd.f32 %v213, %v313
        %v315 = vpop.f32.mrb[0].mxu0
        %v316 = vadd.f32 %v213, %v315
        %317 = vdwg.mxu0
        %v318 = vand.u32 %v227, 4294901760
        %v319 = vsub.f32 %v227, %v318
        %v320 = vand.u32 %v319, 4294901760
        %v321 = vsub.f32 %v319, %v320
        %v322 = vand.u32 %v321, 4294901760
        %323 = vmatprep.subr.mxu0 %v322
        %v324 = vand.u32 %v225, 4294901760
        %v325 = vsub.f32 %v225, %v324
        %v326 = vand.u32 %v325, 4294901760
        %v327 = vsub.f32 %v325, %v326
        %v328 = vand.u32 %v327, 4294901760
        %329 = vmatpush1.msra.mxu0 %v328
        %330 = vmatprep.subr.mxu0 0.0
        %331 = vmatpush1.msra.mxu0 0.0
        %332 = vmatprep.subr.mxu0 0.0
        %333 = vmatpush1.msra.mxu0 0.0
        %334 = vmatprep.subr.mxu0 0.0
        %335 = vmatpush1.msra.mxu0 0.0
        %336 = vmatprep.subr.mxu0 0.0
        %337 = vmatpush1.msra.mxu0 0.0
        %338 = vmatprep.subr.mxu0 0.0
        %339 = vmatpush1.msra.mxu0 0.0
        %340 = vmatprep.subr.mxu0 0.0
        %341 = vmatpush1.msra.mxu0 0.0
        %342 = vmatprep.subr.mxu0 0.0
        %343 = vmatpush1.msra.mxu0 0.0
        %344 = vmatprep.subr.mxu0 0.0
        %345 = vmatpush1.msra.mxu0 0.0
        %346 = vmatprep.subr.mxu0 0.0
        %347 = vmatpush1.msra.mxu0 0.0
        %348 = vmatprep.subr.mxu0 0.0
        %349 = vmatpush1.msra.mxu0 0.0
        %350 = vmatprep.subr.mxu0 0.0
        %351 = vmatpush1.msra.mxu0 0.0
        %352 = vmatprep.subr.mxu0 0.0
        %353 = vmatpush1.msra.mxu0 0.0
        %354 = vmatprep.subr.mxu0 0.0
        %355 = vmatpush1.msra.mxu0 0.0
        %356 = vmatprep.subr.mxu0 0.0
        %357 = vmatpush1.msra.mxu0 0.0
        %358 = vmatprep.subr.mxu0 0.0
        %359 = vmatpush1.msra.mxu0 0.0
        %360 = vmatprep.subr.mxu0 0.0
        %361 = vmatpush1.msra.mxu0 0.0
        %362 = vmatprep.subr.mxu0 0.0
        %363 = vmatpush1.msra.mxu0 0.0
        %364 = vmatprep.subr.mxu0 0.0
        %365 = vmatpush1.msra.mxu0 0.0
        %366 = vmatprep.subr.mxu0 0.0
        %367 = vmatpush1.msra.mxu0 0.0
        %368 = vmatprep.subr.mxu0 0.0
        %369 = vmatpush1.msra.mxu0 0.0
        %370 = vmatprep.subr.mxu0 0.0
        %371 = vmatpush1.msra.mxu0 0.0
        %372 = vmatprep.subr.mxu0 0.0
        %373 = vmatpush1.msra.mxu0 0.0
        %374 = vmatprep.subr.mxu0 0.0
        %375 = vmatpush1.msra.mxu0 0.0
        %376 = vmatprep.subr.mxu0 0.0
        %377 = vmatpush1.msra.mxu0 0.0
        %378 = vmatprep.subr.mxu0 0.0
        %379 = vmatpush1.msra.mxu0 0.0
        %380 = vmatprep.subr.mxu0 0.0
        %381 = vmatpush1.msra.mxu0 0.0
        %382 = vmatprep.subr.mxu0 0.0
        %383 = vmatpush1.msra.mxu0 0.0
        %384 = vmatprep.subr.mxu0 0.0
        %385 = vmatpush1.msra.mxu0 0.0
        %386 = vmatprep.subr.mxu0 0.0
        %387 = vmatpush1.msra.mxu0 0.0
        %388 = vmatprep.subr.mxu0 0.0
        %389 = vmatpush1.msra.mxu0 0.0
        %390 = vmatprep.subr.mxu0 0.0
        %391 = vmatpush1.msra.mxu0 0.0
        %392 = vmatprep.mubr.f32.mxu0 0.0
        %v393 = vand.u32 %v219, 4294901760
        %394 = vmatmul.mubr.f32.gmra.mrb[0].mxu0 %v393
        %v395 = vpop.f32.mrb[0].mxu0
        %v396 = vadd.f32 %v303, %v395
        %v397 = vpop.f32.mrb[0].mxu0
        %v398 = vadd.f32 %v305, %v397
        %399 = vmatprep.mubr.f32.mxu0 0.0
        %v400 = vand.u32 %v222, 4294901760
        %401 = vmatmul.mubr.f32.gmra.mrb[0].mxu0 %v400
        %v402 = vpop.f32.mrb[0].mxu0
        %v403 = vadd.f32 %v314, %v402
        %v404 = vpop.f32.mrb[0].mxu0
        %v405 = vadd.f32 %v316, %v404
        %406 = vdwg.mxu0
        %v407 = vand.u32 %v227, 4294901760
        %v408 = vsub.f32 %v227, %v407
        %409 = vmatprep.subr.mxu0 %v408
        %v410 = vand.u32 %v225, 4294901760
        %v411 = vsub.f32 %v225, %v410
        %412 = vmatpush1.msra.mxu0 %v411
        %413 = vmatprep.subr.mxu0 0.0
        %414 = vmatpush1.msra.mxu0 0.0
        %415 = vmatprep.subr.mxu0 0.0
        %416 = vmatpush1.msra.mxu0 0.0
        %417 = vmatprep.subr.mxu0 0.0
        %418 = vmatpush1.msra.mxu0 0.0
        %419 = vmatprep.subr.mxu0 0.0
        %420 = vmatpush1.msra.mxu0 0.0
        %421 = vmatprep.subr.mxu0 0.0
        %422 = vmatpush1.msra.mxu0 0.0
        %423 = vmatprep.subr.mxu0 0.0
        %424 = vmatpush1.msra.mxu0 0.0
        %425 = vmatprep.subr.mxu0 0.0
        %426 = vmatpush1.msra.mxu0 0.0
        %427 = vmatprep.subr.mxu0 0.0
        %428 = vmatpush1.msra.mxu0 0.0
        %429 = vmatprep.subr.mxu0 0.0
        %430 = vmatpush1.msra.mxu0 0.0
        %431 = vmatprep.subr.mxu0 0.0
        %432 = vmatpush1.msra.mxu0 0.0
        %433 = vmatprep.subr.mxu0 0.0
        %434 = vmatpush1.msra.mxu0 0.0
        %435 = vmatprep.subr.mxu0 0.0
        %436 = vmatpush1.msra.mxu0 0.0
        %437 = vmatprep.subr.mxu0 0.0
        %438 = vmatpush1.msra.mxu0 0.0
        %439 = vmatprep.subr.mxu0 0.0
        %440 = vmatpush1.msra.mxu0 0.0
        %441 = vmatprep.subr.mxu0 0.0
        %442 = vmatpush1.msra.mxu0 0.0
        %443 = vmatprep.subr.mxu0 0.0
        %444 = vmatpush1.msra.mxu0 0.0
        %445 = vmatprep.subr.mxu0 0.0
        %446 = vmatpush1.msra.mxu0 0.0
        %447 = vmatprep.subr.mxu0 0.0
        %448 = vmatpush1.msra.mxu0 0.0
        %449 = vmatprep.subr.mxu0 0.0
        %450 = vmatpush1.msra.mxu0 0.0
        %451 = vmatprep.subr.mxu0 0.0
        %452 = vmatpush1.msra.mxu0 0.0
        %453 = vmatprep.subr.mxu0 0.0
        %454 = vmatpush1.msra.mxu0 0.0
        %455 = vmatprep.subr.mxu0 0.0
        %456 = vmatpush1.msra.mxu0 0.0
        %457 = vmatprep.subr.mxu0 0.0
        %458 = vmatpush1.msra.mxu0 0.0
        %459 = vmatprep.subr.mxu0 0.0
        %460 = vmatpush1.msra.mxu0 0.0
        %461 = vmatprep.subr.mxu0 0.0
        %462 = vmatpush1.msra.mxu0 0.0
        %463 = vmatprep.subr.mxu0 0.0
        %464 = vmatpush1.msra.mxu0 0.0
        %465 = vmatprep.subr.mxu0 0.0
        %466 = vmatpush1.msra.mxu0 0.0
        %467 = vmatprep.subr.mxu0 0.0
        %468 = vmatpush1.msra.mxu0 0.0
        %469 = vmatprep.subr.mxu0 0.0
        %470 = vmatpush1.msra.mxu0 0.0
        %471 = vmatprep.subr.mxu0 0.0
        %472 = vmatpush1.msra.mxu0 0.0
        %473 = vmatprep.subr.mxu0 0.0
        %474 = vmatpush1.msra.mxu0 0.0
        %475 = vmatprep.mubr.f32.mxu0 0.0
        %v476 = vand.u32 %v219, 4294901760
        %v477 = vsub.f32 %v219, %v476
        %478 = vmatmul.mubr.f32.gmra.mrb[0].mxu0 %v477
        %v479 = vpop.f32.mrb[0].mxu0
        %v480 = vadd.f32 %v396, %v479
        %v481 = vpop.f32.mrb[0].mxu0
        %v482 = vadd.f32 %v398, %v481
        %483 = vmatprep.mubr.f32.mxu0 0.0
        %v484 = vand.u32 %v222, 4294901760
        %v485 = vsub.f32 %v222, %v484
        %486 = vmatmul.mubr.f32.gmra.mrb[0].mxu0 %v485
        %v487 = vpop.f32.mrb[0].mxu0
        %v488 = vadd.f32 %v403, %v487
        %v489 = vpop.f32.mrb[0].mxu0
        %v490 = vadd.f32 %v405, %v489
        %491 = vdwg.mxu0
        %v492 = vand.u32 %v227, 4294901760
        %493 = vmatprep.subr.mxu0 %v492
        %v494 = vand.u32 %v225, 4294901760
        %495 = vmatpush1.msra.mxu0 %v494
        %496 = vmatprep.subr.mxu0 0.0
        %497 = vmatpush1.msra.mxu0 0.0
        %498 = vmatprep.subr.mxu0 0.0
        %499 = vmatpush1.msra.mxu0 0.0
        %500 = vmatprep.subr.mxu0 0.0
        %501 = vmatpush1.msra.mxu0 0.0
        %502 = vmatprep.subr.mxu0 0.0
        %503 = vmatpush1.msra.mxu0 0.0
        %504 = vmatprep.subr.mxu0 0.0
        %505 = vmatpush1.msra.mxu0 0.0
        %506 = vmatprep.subr.mxu0 0.0
        %507 = vmatpush1.msra.mxu0 0.0
        %508 = vmatprep.subr.mxu0 0.0
        %509 = vmatpush1.msra.mxu0 0.0
        %510 = vmatprep.subr.mxu0 0.0
        %511 = vmatpush1.msra.mxu0 0.0
        %512 = vmatprep.subr.mxu0 0.0
        %513 = vmatpush1.msra.mxu0 0.0
        %514 = vmatprep.subr.mxu0 0.0
        %515 = vmatpush1.msra.mxu0 0.0
        %516 = vmatprep.subr.mxu0 0.0
        %517 = vmatpush1.msra.mxu0 0.0
        %518 = vmatprep.subr.mxu0 0.0
        %519 = vmatpush1.msra.mxu0 0.0
        %520 = vmatprep.subr.mxu0 0.0
        %521 = vmatpush1.msra.mxu0 0.0
        %522 = vmatprep.subr.mxu0 0.0
        %523 = vmatpush1.msra.mxu0 0.0
        %524 = vmatprep.subr.mxu0 0.0
        %525 = vmatpush1.msra.mxu0 0.0
        %526 = vmatprep.subr.mxu0 0.0
        %527 = vmatpush1.msra.mxu0 0.0
        %528 = vmatprep.subr.mxu0 0.0
        %529 = vmatpush1.msra.mxu0 0.0
        %530 = vmatprep.subr.mxu0 0.0
        %531 = vmatpush1.msra.mxu0 0.0
        %532 = vmatprep.subr.mxu0 0.0
        %533 = vmatpush1.msra.mxu0 0.0
        %534 = vmatprep.subr.mxu0 0.0
        %535 = vmatpush1.msra.mxu0 0.0
        %536 = vmatprep.subr.mxu0 0.0
        %537 = vmatpush1.msra.mxu0 0.0
        %538 = vmatprep.subr.mxu0 0.0
        %539 = vmatpush1.msra.mxu0 0.0
        %540 = vmatprep.subr.mxu0 0.0
        %541 = vmatpush1.msra.mxu0 0.0
        %542 = vmatprep.subr.mxu0 0.0
        %543 = vmatpush1.msra.mxu0 0.0
        %544 = vmatprep.subr.mxu0 0.0
        %545 = vmatpush1.msra.mxu0 0.0
        %546 = vmatprep.subr.mxu0 0.0
        %547 = vmatpush1.msra.mxu0 0.0
        %548 = vmatprep.subr.mxu0 0.0
        %549 = vmatpush1.msra.mxu0 0.0
        %550 = vmatprep.subr.mxu0 0.0
        %551 = vmatpush1.msra.mxu0 0.0
        %552 = vmatprep.subr.mxu0 0.0
        %553 = vmatpush1.msra.mxu0 0.0
        %554 = vmatprep.subr.mxu0 0.0
        %555 = vmatpush1.msra.mxu0 0.0
        %556 = vmatprep.subr.mxu0 0.0
        %557 = vmatpush1.msra.mxu0 0.0
        %558 = vmatprep.mubr.f32.mxu0 0.0
        %v559 = vand.u32 %v219, 4294901760
        %v560 = vsub.f32 %v219, %v559
        %v561 = vand.u32 %v560, 4294901760
        %562 = vmatmul.mubr.f32.gmra.mrb[0].mxu0 %v561
        %v563 = vpop.f32.mrb[0].mxu0
        %v564 = vadd.f32 %v480, %v563
        %v565 = vpop.f32.mrb[0].mxu0
        %v566 = vadd.f32 %v482, %v565
        %567 = vmatprep.mubr.f32.mxu0 0.0
        %v568 = vand.u32 %v222, 4294901760
        %v569 = vsub.f32 %v222, %v568
        %v570 = vand.u32 %v569, 4294901760
        %571 = vmatmul.mubr.f32.gmra.mrb[0].mxu0 %v570
        %v572 = vpop.f32.mrb[0].mxu0
        %v573 = vadd.f32 %v488, %v572
        %v574 = vpop.f32.mrb[0].mxu0
        %v575 = vadd.f32 %v490, %v574
        %576 = vdwg.mxu0
        %v577 = vand.u32 %v227, 4294901760
        %v578 = vsub.f32 %v227, %v577
        %v579 = vand.u32 %v578, 4294901760
        %580 = vmatprep.subr.mxu0 %v579
        %v581 = vand.u32 %v225, 4294901760
        %v582 = vsub.f32 %v225, %v581
        %v583 = vand.u32 %v582, 4294901760
        %584 = vmatpush1.msra.mxu0 %v583
        %585 = vmatprep.subr.mxu0 0.0
        %586 = vmatpush1.msra.mxu0 0.0
        %587 = vmatprep.subr.mxu0 0.0
        %588 = vmatpush1.msra.mxu0 0.0
        %589 = vmatprep.subr.mxu0 0.0
        %590 = vmatpush1.msra.mxu0 0.0
        %591 = vmatprep.subr.mxu0 0.0
        %592 = vmatpush1.msra.mxu0 0.0
        %593 = vmatprep.subr.mxu0 0.0
        %594 = vmatpush1.msra.mxu0 0.0
        %595 = vmatprep.subr.mxu0 0.0
        %596 = vmatpush1.msra.mxu0 0.0
        %597 = vmatprep.subr.mxu0 0.0
        %598 = vmatpush1.msra.mxu0 0.0
        %599 = vmatprep.subr.mxu0 0.0
        %600 = vmatpush1.msra.mxu0 0.0
        %601 = vmatprep.subr.mxu0 0.0
        %602 = vmatpush1.msra.mxu0 0.0
        %603 = vmatprep.subr.mxu0 0.0
        %604 = vmatpush1.msra.mxu0 0.0
        %605 = vmatprep.subr.mxu0 0.0
        %606 = vmatpush1.msra.mxu0 0.0
        %607 = vmatprep.subr.mxu0 0.0
        %608 = vmatpush1.msra.mxu0 0.0
        %609 = vmatprep.subr.mxu0 0.0
        %610 = vmatpush1.msra.mxu0 0.0
        %611 = vmatprep.subr.mxu0 0.0
        %612 = vmatpush1.msra.mxu0 0.0
        %613 = vmatprep.subr.mxu0 0.0
        %614 = vmatpush1.msra.mxu0 0.0
        %615 = vmatprep.subr.mxu0 0.0
        %616 = vmatpush1.msra.mxu0 0.0
        %617 = vmatprep.subr.mxu0 0.0
        %618 = vmatpush1.msra.mxu0 0.0
        %619 = vmatprep.subr.mxu0 0.0
        %620 = vmatpush1.msra.mxu0 0.0
        %621 = vmatprep.subr.mxu0 0.0
        %622 = vmatpush1.msra.mxu0 0.0
        %623 = vmatprep.subr.mxu0 0.0
        %624 = vmatpush1.msra.mxu0 0.0
        %625 = vmatprep.subr.mxu0 0.0
        %626 = vmatpush1.msra.mxu0 0.0
        %627 = vmatprep.subr.mxu0 0.0
        %628 = vmatpush1.msra.mxu0 0.0
        %629 = vmatprep.subr.mxu0 0.0
        %630 = vmatpush1.msra.mxu0 0.0
        %631 = vmatprep.subr.mxu0 0.0
        %632 = vmatpush1.msra.mxu0 0.0
        %633 = vmatprep.subr.mxu0 0.0
        %634 = vmatpush1.msra.mxu0 0.0
        %635 = vmatprep.subr.mxu0 0.0
        %636 = vmatpush1.msra.mxu0 0.0
        %637 = vmatprep.subr.mxu0 0.0
        %638 = vmatpush1.msra.mxu0 0.0
        %639 = vmatprep.subr.mxu0 0.0
        %640 = vmatpush1.msra.mxu0 0.0
        %641 = vmatprep.subr.mxu0 0.0
        %642 = vmatpush1.msra.mxu0 0.0
        %643 = vmatprep.subr.mxu0 0.0
        %644 = vmatpush1.msra.mxu0 0.0
        %645 = vmatprep.subr.mxu0 0.0
        %646 = vmatpush1.msra.mxu0 0.0
        %647 = vmatprep.mubr.f32.mxu0 0.0
        %v648 = vand.u32 %v219, 4294901760
        %649 = vmatmul.mubr.f32.gmra.mrb[0].mxu0 %v648
        %v650 = vpop.f32.mrb[0].mxu0
        %v651 = vadd.f32 %v564, %v650
        %v652 = vpop.f32.mrb[0].mxu0
        %v653 = vadd.f32 %v566, %v652
        %654 = vmatprep.mubr.f32.mxu0 0.0
        %v655 = vand.u32 %v222, 4294901760
        %656 = vmatmul.mubr.f32.gmra.mrb[0].mxu0 %v655
        %v657 = vpop.f32.mrb[0].mxu0
        %v658 = vadd.f32 %v573, %v657
        %v659 = vpop.f32.mrb[0].mxu0
        %v660 = vadd.f32 %v575, %v659
        %661 = vdwg.mxu0
        %v662 = vand.u32 %v227, 4294901760
        %663 = vmatprep.subr.mxu0 %v662
        %v664 = vand.u32 %v225, 4294901760
        %665 = vmatpush1.msra.mxu0 %v664
        %666 = vmatprep.subr.mxu0 0.0
        %667 = vmatpush1.msra.mxu0 0.0
        %668 = vmatprep.subr.mxu0 0.0
        %669 = vmatpush1.msra.mxu0 0.0
        %670 = vmatprep.subr.mxu0 0.0
        %671 = vmatpush1.msra.mxu0 0.0
        %672 = vmatprep.subr.mxu0 0.0
        %673 = vmatpush1.msra.mxu0 0.0
        %674 = vmatprep.subr.mxu0 0.0
        %675 = vmatpush1.msra.mxu0 0.0
        %676 = vmatprep.subr.mxu0 0.0
        %677 = vmatpush1.msra.mxu0 0.0
        %678 = vmatprep.subr.mxu0 0.0
        %679 = vmatpush1.msra.mxu0 0.0
        %680 = vmatprep.subr.mxu0 0.0
        %681 = vmatpush1.msra.mxu0 0.0
        %682 = vmatprep.subr.mxu0 0.0
        %683 = vmatpush1.msra.mxu0 0.0
        %684 = vmatprep.subr.mxu0 0.0
        %685 = vmatpush1.msra.mxu0 0.0
        %686 = vmatprep.subr.mxu0 0.0
        %687 = vmatpush1.msra.mxu0 0.0
        %688 = vmatprep.subr.mxu0 0.0
        %689 = vmatpush1.msra.mxu0 0.0
        %690 = vmatprep.subr.mxu0 0.0
        %691 = vmatpush1.msra.mxu0 0.0
        %692 = vmatprep.subr.mxu0 0.0
        %693 = vmatpush1.msra.mxu0 0.0
        %694 = vmatprep.subr.mxu0 0.0
        %695 = vmatpush1.msra.mxu0 0.0
        %696 = vmatprep.subr.mxu0 0.0
        %697 = vmatpush1.msra.mxu0 0.0
        %698 = vmatprep.subr.mxu0 0.0
        %699 = vmatpush1.msra.mxu0 0.0
        %700 = vmatprep.subr.mxu0 0.0
        %701 = vmatpush1.msra.mxu0 0.0
        %702 = vmatprep.subr.mxu0 0.0
        %703 = vmatpush1.msra.mxu0 0.0
        %704 = vmatprep.subr.mxu0 0.0
        %705 = vmatpush1.msra.mxu0 0.0
        %706 = vmatprep.subr.mxu0 0.0
        %707 = vmatpush1.msra.mxu0 0.0
        %708 = vmatprep.subr.mxu0 0.0
        %709 = vmatpush1.msra.mxu0 0.0
        %710 = vmatprep.subr.mxu0 0.0
        %711 = vmatpush1.msra.mxu0 0.0
        %712 = vmatprep.subr.mxu0 0.0
        %713 = vmatpush1.msra.mxu0 0.0
        %714 = vmatprep.subr.mxu0 0.0
        %715 = vmatpush1.msra.mxu0 0.0
        %716 = vmatprep.subr.mxu0 0.0
        %717 = vmatpush1.msra.mxu0 0.0
        %718 = vmatprep.subr.mxu0 0.0
        %719 = vmatpush1.msra.mxu0 0.0
        %720 = vmatprep.subr.mxu0 0.0
        %721 = vmatpush1.msra.mxu0 0.0
        %722 = vmatprep.subr.mxu0 0.0
        %723 = vmatpush1.msra.mxu0 0.0
        %724 = vmatprep.subr.mxu0 0.0
        %725 = vmatpush1.msra.mxu0 0.0
        %726 = vmatprep.subr.mxu0 0.0
        %727 = vmatpush1.msra.mxu0 0.0
        %728 = vmatprep.mubr.f32.mxu0 0.0
        %v729 = vand.u32 %v219, 4294901760
        %730 = vmatmul.mubr.f32.gmra.mrb[0].mxu0 %v729
        %v731 = vpop.f32.mrb[0].mxu0
        %v732 = vadd.f32 %v651, %v731
        %v733 = vpop.f32.mrb[0].mxu0
        %v734 = vadd.f32 %v653, %v733
        %735 = vmatprep.mubr.f32.mxu0 0.0
        %v736 = vand.u32 %v222, 4294901760
        %737 = vmatmul.mubr.f32.gmra.mrb[0].mxu0 %v736
        %v738 = vpop.f32.mrb[0].mxu0
        %v739 = vadd.f32 %v658, %v738
        %v740 = vpop.f32.mrb[0].mxu0
        %v741 = vadd.f32 %v660, %v740
        %742 = vdwg.mxu0
        %743 = vst [vmem:[%s188] sm:$0xff] %v732
        %744 = vst [vmem:[%s188 + $0x8] sm:$0xff] %v734
        %745 = vst [vmem:[%s188 + $0x10] sm:$0xff] %v739
        %746 = vst [vmem:[%s188 + $0x18] sm:$0xff] %v741
        %s747 = sand.u32 %s109, 1
        %s748 = scalar_lea.sflag [#allocation3], %s747
        %s749 = sand.u32 %s109, 1
        %s750 = smul.addr %s749, 32
        %s751 = scalar_lea.vmem [#allocation2], %s750
        // Predicated region
        $region33: #{tpu_custom_call.1} parent=31 // pred_check
          %p752 = pneg %p119
        $region34: #{tpu_custom_call.1} parent=31 // pred_check_branch
          %754 = sbr.rel (%p752) target = $region36
        $region35: #{tpu_custom_call.1} parent=31 // pred_region
          %s755 = smul.u32 2, %s22
          %s757 = ssub.s32 512, 512
          %758 = vsyncadd %s748, %s757
          %s759 = smul.addr %s21, 4
          %s760 = sadd.s32 %s755, %s759
          %s761 = smul.addr %s760, 128
          %s762 = scalar_lea.hbm %s3, %s761
          %s763 = sshll.u32 %s751, 4
          %s764 = int_to_ptr.vmem [resolvable:$true] %s763
          %769 = dma.vmem_to_hbm [thread:$0]  %s764, 512, %s762, %s748, 256, 256, 16
        $region36: #{tpu_custom_call.1} parent=31 // pred_fallthru
          _
      $region32: #{tpu_custom_call.1} parent=5 // pred_fallthru
        _
      %p770 = scmp.le.s32.totalorder 2, %s12
      // Predicated region
      $region37: #{tpu_custom_call.1} parent=5 // pred_check
        %p771 = pneg %p770
      $region38: #{tpu_custom_call.1} parent=5 // pred_check_branch
        %773 = sbr.rel (%p771) target = $region40
      $region39: #{tpu_custom_call.1} parent=5 // pred_region
        %s774 = ssub.s32 %s12, 2
        // Predicated region
        $region41: #{tpu_custom_call.1} parent=39 // pred_check
          %p775 = pneg %p125
        $region42: #{tpu_custom_call.1} parent=39 // pred_check_branch
          %777 = sbr.rel (%p775) target = $region44
        $region43: #{tpu_custom_call.1} parent=39 // pred_region
          %s778 = sand.u32 %s110, 1
          %s779 = scalar_lea.sflag [#allocation3], %s778
          %s780 = sand.u32 %s110, 1
          %s781 = smul.addr %s780, 32
          %s782 = scalar_lea.vmem [#allocation2], %s781
          %783 = dma.done %s779, 512
        $region44: #{tpu_custom_call.1} parent=39 // pred_fallthru
          _
      $region40: #{tpu_custom_call.1} parent=5 // pred_fallthru
        _
    $region6: #{tpu_custom_call.1} parent=1 // loop_footer
      %s16 = sadd.s32 1, %s12
    $region7: #{tpu_custom_call.1} parent=1 // loop_footer_branch
      %11 = sbr.rel target = $region3
    $region8: #{tpu_custom_call.1} parent=1 // loop_exit
      _
    %784 = vsyncpa [#allocation3], 1
    %s785 = scalar_lea.sflag [#allocation3], 1
    %786 = vsyncpa %s785, 1

</llo_original>
